<compile_context>
chip_gen: v6e
topology: v6e:2x2x1
jax: 0.10.0
libtpu: 0.0.40
codegen_flags: <defaults>
</compile_context>

<pallas_src>
import jax
import jax.numpy as jnp
from jax.experimental import pallas as pl
from jax.experimental.pallas import tpu as pltpu  # noqa: F401  (kept for TPU-specific tweaks)

# ---------------- synthetic config (small, deterministic) ----------------
B       = 2     # batch
N_CTX   = 2     # context panels
N_CAND  = 8     # candidates (fixed by the `.repeat(1, 8, 1, 1)` in the module)
S       = 16    # SymbolModel input feature dim
E       = 32    # panel embedding dim
GS      = 8     # SharedGroupMLP group size
G       = E // GS            # 4 groups
C       = N_CTX + 1          # panels per merged sample (2 context + 1 candidate)
H1      = 32                 # SharedGroupMLP hidden width (per group)
OUT_G   = 8                  # SharedGroupMLP output per group
D       = G * OUT_G          # message embedding dim (matches x's last dim) = 32
HT      = G * H1             # block-diagonal hidden width = 128 (lane-dense)
OUT_PAD = 128                # lane-dense output slab width


def discri_listener_kernel(ctx_ref, cand_ref, x_ref,
                           w1c_ref, w1k_ref, b1_ref, w2_ref, b2_ref,
                           out_ref):
    # ---- layer 1: SymbolModel linear folded into block-diagonal group-MLP weights ----
    # Context contribution: once per batch row (hoisted out of the candidate axis).
    ctx_h = jnp.dot(ctx_ref[...], w1c_ref[...],
                    preferred_element_type=jnp.float32)                        # (B, HT)
    # Candidate contribution: all B*N_CAND candidate rows in one matmul.
    cand_h = jnp.dot(cand_ref[...], w1k_ref[...],
                     preferred_element_type=jnp.float32) + b1_ref[...]         # (B*N_CAND, HT)
    # ReLU(ctx + cand + b1): broadcast per-batch context term over the 8 candidates.
    # (16,128)<->(2,8,128) reshapes only split/merge sublanes — no lane relayout.
    h = jnp.maximum(cand_h.reshape(B, N_CAND, HT) + ctx_h[:, None, :], 0.0)
    h = h.reshape(B * N_CAND, HT)                                              # lane-dense (16, 128)

    # ---- layer 2 (block-diagonal) + tanh ----
    emb = jnp.tanh(jnp.dot(h, w2_ref[...],
                           preferred_element_type=jnp.float32) + b2_ref[...])  # (16, D)
    emb = emb.reshape(B, N_CAND, D)

    # ---- dots = matmul(emb, x.unsqueeze(-1)).squeeze(-1) ----
    # VPU multiply + XLU lane reduce (kept off the MXU on purpose at this size).
    dots = jnp.sum(emb * x_ref[...][:, None, :], axis=-1)                      # (B, N_CAND)

    # Lane-dense output slab: zero-init once, then a static slice store.
    out_ref[...] = jnp.zeros_like(out_ref)
    out_ref[:, :N_CAND] = dots


def fuse_params(params):
    """ONE-TIME host-side weight prep (call at parameter-init time, not per forward).

    Builds block-diagonal SharedGroupMLP weights preserving the per-group (C, GS)->C*GS
    flatten order, then folds the SymbolModel linear (wv, bv) into layer 1:
        panel_e = panel_raw @ wv + bv ;  flat_panels @ W1_blk
          = concat_c( panel_raw[c] @ (wv @ W1_blk[c*E:(c+1)*E]) ) + tile(bv, C) @ W1_blk
    """
    wv, bv, w1, b1, w2, b2 = params

    # Block-diagonal layer-1 weight over the flattened (C, E) panel slab:
    #   W1_blk[c*E + g*GS + f, g*H1 + j] = w1[c*GS + f, j]
    W1_blk = jnp.zeros((C * E, HT), jnp.float32)
    for g in range(G):
        for c in range(C):
            W1_blk = W1_blk.at[c * E + g * GS: c * E + (g + 1) * GS,
                               g * H1:(g + 1) * H1].set(w1[c * GS:(c + 1) * GS, :])
    # Block-diagonal layer-2 weight.
    W2_blk = jnp.zeros((HT, D), jnp.float32)
    for g in range(G):
        W2_blk = W2_blk.at[g * H1:(g + 1) * H1,
                           g * OUT_G:(g + 1) * OUT_G].set(w2)
    b1_blk = jnp.tile(b1, (1, G))                                              # (1, HT)
    b2_blk = jnp.tile(b2, (1, G))                                              # (1, D)

    # Fold SymbolModel (wv, bv) into layer 1.
    W1_ctx_fused = jnp.concatenate(
        [wv @ W1_blk[c * E:(c + 1) * E] for c in range(N_CTX)], axis=0)        # (N_CTX*S, HT)
    W1_cand_fused = wv @ W1_blk[N_CTX * E:]                                    # (S, HT)
    b1_fused = b1_blk + jnp.tile(bv, (1, C)) @ W1_blk                          # (1, HT)

    return (W1_ctx_fused, W1_cand_fused, b1_fused, W2_blk, b2_blk)


def discri_listener(x_msg, listener_context, listener_candidates, fused_params):
    """Pallas wrapper: no grid (single invocation), every operand a full-extent VMEM block
    (block == full array shape satisfies the (8,128) rule)."""
    W1c, W1k, b1f, W2b, b2b = fused_params

    # Wrapper-side flattening (free XLA layout plumbing, zero kernel cost).
    ctx_flat  = listener_context.reshape(B, N_CTX * S)                          # (B, 32)
    cand_flat = listener_candidates.reshape(B * N_CAND, S)                      # (16, 16)

    def spec(shape):
        nd = len(shape)
        return pl.BlockSpec(shape, lambda *_, _nd=nd: (0,) * _nd)

    operands = (ctx_flat, cand_flat, x_msg, W1c, W1k, b1f, W2b, b2b)

    cost = pl.CostEstimate(flops=220_000,
                           transcendentals=B * N_CAND * D,
                           bytes_accessed=44 * 1024)

    out = pl.pallas_call(
        discri_listener_kernel,
        out_shape=jax.ShapeDtypeStruct((B, OUT_PAD), jnp.float32),
        in_specs=[spec(op.shape) for op in operands],
        out_specs=spec((B, OUT_PAD)),
        cost_estimate=cost,
    )(*operands)

    return out[:, :N_CAND]


def reference_jax(x_msg, ctx, cand, params):
    """Pure-JAX reference mirroring the PyTorch forward (per-group loop form)."""
    wv, bv, w1, b1, w2, b2 = params
    ctx_e  = ctx @ wv + bv[0]
    cand_e = cand @ wv + bv[0]
    ctx_rep = jnp.broadcast_to(ctx_e[:, None, :, :], (B, N_CAND, N_CTX, E))
    merged  = jnp.concatenate([ctx_rep, cand_e[:, :, None, :]], axis=2)
    merged  = merged.reshape(B * N_CAND, C, E)
    outs = []
    for g in range(G):
        sl = merged[:, :, g * GS:(g + 1) * GS].reshape(B * N_CAND, C * GS)
        h  = jnp.maximum(sl @ w1 + b1[0], 0.0)
        outs.append(h @ w2 + b2[0])
    emb = jnp.tanh(jnp.concatenate(outs, axis=-1)).reshape(B, N_CAND, D)
    return jnp.einsum('bnd,bd->bn', emb, x_msg)


def init_params(key):
    def linear(k, fan_in, shape_w, shape_b):
        kw, kb = jax.random.split(k)
        lim = 1.0 / jnp.sqrt(fan_in)
        w = jax.random.uniform(kw, shape_w, jnp.float32, -lim, lim)
        b = jax.random.uniform(kb, shape_b, jnp.float32, -lim, lim)
        return w, b
    k1, k2, k3 = jax.random.split(key, 3)
    wv, bv = linear(k1, S,      (S, E),       (1, E))       # SymbolModel linear
    w1, b1 = linear(k2, C * GS, (C * GS, H1), (1, H1))      # SharedGroupMLP layer 1
    w2, b2 = linear(k3, H1,     (H1, OUT_G),  (1, OUT_G))   # SharedGroupMLP layer 2
    return (wv, bv, w1, b1, w2, b2)


if __name__ == "__main__":
    key = jax.random.PRNGKey(0)
    k_p, k_ctx, k_cand, k_x = jax.random.split(key, 4)
    params = init_params(k_p)

    # One-time weight prep (out of the per-call path).
    fused_params = jax.tree_util.tree_map(jax.block_until_ready, fuse_params(params))

    listener_context    = jax.random.normal(k_ctx,  (B, N_CTX, S),  jnp.float32)
    listener_candidates = jax.random.normal(k_cand, (B, N_CAND, S), jnp.float32)
    x_msg               = jax.random.normal(k_x,    (B, D),         jnp.float32)

    dots = discri_listener(x_msg, listener_context, listener_candidates, fused_params)
    dots = jax.block_until_ready(dots)

    ref = reference_jax(x_msg, listener_context, listener_candidates, params)
    assert dots.shape == (B, N_CAND)
    assert bool(jnp.allclose(dots, ref, atol=1e-4, rtol=1e-4)), "mismatch vs JAX reference"
    print("KERNEL_OK")
</pallas_src>

<mosaic_0001>
module attributes {stable_mosaic.version = 11 : i64} {
  func.func @discri_listener_kernel(%arg0: memref<2x32xf32, #tpu.memory_space<vmem>>, %arg1: memref<16x16xf32, #tpu.memory_space<vmem>>, %arg2: memref<2x32xf32, #tpu.memory_space<vmem>>, %arg3: memref<32x128xf32, #tpu.memory_space<vmem>>, %arg4: memref<16x128xf32, #tpu.memory_space<vmem>>, %arg5: memref<1x128xf32, #tpu.memory_space<vmem>>, %arg6: memref<128x32xf32, #tpu.memory_space<vmem>>, %arg7: memref<1x32xf32, #tpu.memory_space<vmem>>, %arg8: memref<2x128xf32, #tpu.memory_space<vmem>>) attributes {dimension_semantics = [], scalar_prefetch = 0 : i64, scratch_operands = 0 : i64, tpu.core_type = #tpu.core_type<tc>} {
    %c0 = arith.constant 0 : index
    %c0_0 = arith.constant 0 : index
    %0 = vector.load %arg0[%c0, %c0_0] : memref<2x32xf32, #tpu.memory_space<vmem>>, vector<2x32xf32>
    %c0_1 = arith.constant 0 : index
    %c0_2 = arith.constant 0 : index
    %1 = vector.load %arg3[%c0_1, %c0_2] : memref<32x128xf32, #tpu.memory_space<vmem>>, vector<32x128xf32>
    %cst = arith.constant dense<0.000000e+00> : vector<2x128xf32>
    %2 = tpu.matmul %0, %1, %cst {dimension_numbers = #tpu.dot_dimension_numbers<[1], [0], [0], [1], [0, 0, 1, 1], [], []>} : vector<2x32xf32>, vector<32x128xf32>, vector<2x128xf32> -> vector<2x128xf32>
    %c0_3 = arith.constant 0 : index
    %c0_4 = arith.constant 0 : index
    %3 = vector.load %arg1[%c0_3, %c0_4] : memref<16x16xf32, #tpu.memory_space<vmem>>, vector<16x16xf32>
    %c0_5 = arith.constant 0 : index
    %c0_6 = arith.constant 0 : index
    %4 = vector.load %arg4[%c0_5, %c0_6] : memref<16x128xf32, #tpu.memory_space<vmem>>, vector<16x128xf32>
    %cst_7 = arith.constant dense<0.000000e+00> : vector<16x128xf32>
    %5 = tpu.matmul %3, %4, %cst_7 {dimension_numbers = #tpu.dot_dimension_numbers<[1], [0], [0], [1], [0, 0, 1, 1], [], []>} : vector<16x16xf32>, vector<16x128xf32>, vector<16x128xf32> -> vector<16x128xf32>
    %c0_8 = arith.constant 0 : index
    %c0_9 = arith.constant 0 : index
    %6 = vector.load %arg5[%c0_8, %c0_9] : memref<1x128xf32, #tpu.memory_space<vmem>>, vector<1x128xf32>
    %7 = vector.broadcast %6 : vector<1x128xf32> to vector<16x128xf32>
    %8 = arith.addf %5, %7 : vector<16x128xf32>
    %9 = vector.shape_cast %8 : vector<16x128xf32> to vector<2x8x128xf32>
    %10 = vector.shape_cast %2 : vector<2x128xf32> to vector<2x1x128xf32>
    %11 = vector.broadcast %10 : vector<2x1x128xf32> to vector<2x8x128xf32>
    %12 = arith.addf %9, %11 : vector<2x8x128xf32>
    %cst_10 = arith.constant 0.000000e+00 : f32
    %13 = vector.broadcast %cst_10 : f32 to vector<2x8x128xf32>
    %14 = arith.maximumf %12, %13 : vector<2x8x128xf32>
    %15 = vector.shape_cast %14 : vector<2x8x128xf32> to vector<16x128xf32>
    %c0_11 = arith.constant 0 : index
    %c0_12 = arith.constant 0 : index
    %16 = vector.load %arg6[%c0_11, %c0_12] : memref<128x32xf32, #tpu.memory_space<vmem>>, vector<128x32xf32>
    %cst_13 = arith.constant dense<0.000000e+00> : vector<16x32xf32>
    %17 = tpu.matmul %15, %16, %cst_13 {dimension_numbers = #tpu.dot_dimension_numbers<[1], [0], [0], [1], [0, 0, 1, 1], [], []>} : vector<16x128xf32>, vector<128x32xf32>, vector<16x32xf32> -> vector<16x32xf32>
    %c0_14 = arith.constant 0 : index
    %c0_15 = arith.constant 0 : index
    %18 = vector.load %arg7[%c0_14, %c0_15] : memref<1x32xf32, #tpu.memory_space<vmem>>, vector<1x32xf32>
    %19 = vector.broadcast %18 : vector<1x32xf32> to vector<16x32xf32>
    %20 = arith.addf %17, %19 : vector<16x32xf32>
    %21 = math.tanh %20 : vector<16x32xf32>
    %22 = vector.shape_cast %21 : vector<16x32xf32> to vector<2x8x32xf32>
    %c0_16 = arith.constant 0 : index
    %c0_17 = arith.constant 0 : index
    %23 = vector.load %arg2[%c0_16, %c0_17] : memref<2x32xf32, #tpu.memory_space<vmem>>, vector<2x32xf32>
    %24 = vector.shape_cast %23 : vector<2x32xf32> to vector<2x1x32xf32>
    %25 = vector.broadcast %24 : vector<2x1x32xf32> to vector<2x8x32xf32>
    %26 = arith.mulf %22, %25 : vector<2x8x32xf32>
    %cst_18 = arith.constant dense<0.000000e+00> : vector<2x8xf32>
    %27 = vector.multi_reduction <add>, %26, %cst_18 [2] : vector<2x8x32xf32> to vector<2x8xf32>
    %cst_19 = arith.constant 0.000000e+00 : f32
    %28 = vector.broadcast %cst_19 : f32 to vector<2x128xf32>
    %c0_20 = arith.constant 0 : index
    %c0_21 = arith.constant 0 : index
    %29 = vector.load %arg8[%c0_20, %c0_21] : memref<2x128xf32, #tpu.memory_space<vmem>>, vector<2x128xf32>
    tpu.vector_store %arg8[%c0_20, %c0_21], %28 {strides = array<i32>} : memref<2x128xf32, #tpu.memory_space<vmem>>, vector<2x128xf32>,
    %c0_22 = arith.constant 0 : index
    %c0_23 = arith.constant 0 : index
    %30 = vector.load %arg8[%c0_22, %c0_23] : memref<2x128xf32, #tpu.memory_space<vmem>>, vector<2x8xf32>
    tpu.vector_store %arg8[%c0_22, %c0_23], %27 {strides = array<i32>} : memref<2x128xf32, #tpu.memory_space<vmem>>, vector<2x8xf32>,
    return
  }
}

</mosaic_0001>

<llo_original>
// kernel: tpu_custom_call.1
$region0: #{tpu_custom_call.1}
  #allocation0 [shape = 'u32[]', space=smem, size = 0x4, offset = 0x4, fixed_abs, tag = 'smem constant byte address 0x4 - core index']
  #allocation1 [shape = 'u32[144,128]{1,0:T(1,128)}', space=vmem, size = 0x12000, scoped, tag = 'internal scratch']
  %s0 = inlined_call_operand.vmem [shape: f32[2,32], index: 0, kind: input, shape index: {}]
  %s1 = inlined_call_operand.vmem [shape: f32[16,16], index: 1, kind: input, shape index: {}]
  %s2 = inlined_call_operand.vmem [shape: f32[2,32], index: 2, kind: input, shape index: {}]
  %s3 = inlined_call_operand.vmem [shape: f32[32,128], index: 3, kind: input, shape index: {}]
  %s4 = inlined_call_operand.vmem [shape: f32[16,128], index: 4, kind: input, shape index: {}]
  %s5 = inlined_call_operand.vmem [shape: f32[1,128], index: 5, kind: input, shape index: {}]
  %s6 = inlined_call_operand.vmem [shape: f32[128,32], index: 6, kind: input, shape index: {}]
  %s7 = inlined_call_operand.vmem [shape: f32[1,32], index: 7, kind: input, shape index: {}]
  %s8 = inlined_call_operand.hbm [shape: f32[2,128], index: 8, kind: output, shape index: {}]
  %s9 = sld [smem:[#allocation0]]
  $region42: #{tpu_custom_call.1} parent=0
    _
  %s11 = ssub.s32 1, %s9
  %s12 = scalar_select 0, %s11, %s9
  $region1: #{tpu_custom_call.1} parent=0
    #allocation2 [shape = 'u8[1024]{0}', space=vmem, size = 0x400, scoped, tag = 'output window, operand 0, single buffered']
    #allocation3 [shape = 's32[1]{0}', space=sflag, size = 0x4, scoped, tag = 'scoped memory for tpu_custom_call.1']
    %13 = vsyncpa [#allocation3], 0
    // Predicated region
    $region2: #{tpu_custom_call.1} parent=1 // pred_check
      _
    $region3: #{tpu_custom_call.1} parent=1 // pred_check_branch
      %15 = sbr.rel (0) target = $region5
    $region4: #{tpu_custom_call.1} parent=1 // pred_region
      _
    $region5: #{tpu_custom_call.1} parent=1 // pred_fallthru
      _
    // Predicated region
    $region6: #{tpu_custom_call.1} parent=1 // pred_check
      _
    $region7: #{tpu_custom_call.1} parent=1 // pred_check_branch
      %17 = sbr.rel (0) target = $region9
    $region8: #{tpu_custom_call.1} parent=1 // pred_region
      _
    $region9: #{tpu_custom_call.1} parent=1 // pred_fallthru
      _
    // Predicated region
    $region10: #{tpu_custom_call.1} parent=1 // pred_check
      _
    $region11: #{tpu_custom_call.1} parent=1 // pred_check_branch
      %19 = sbr.rel (0) target = $region13
    $region12: #{tpu_custom_call.1} parent=1 // pred_region
      _
    $region13: #{tpu_custom_call.1} parent=1 // pred_fallthru
      _
    // Predicated region
    $region14: #{tpu_custom_call.1} parent=1 // pred_check
      _
    $region15: #{tpu_custom_call.1} parent=1 // pred_check_branch
      %21 = sbr.rel (0) target = $region17
    $region16: #{tpu_custom_call.1} parent=1 // pred_region
      _
    $region17: #{tpu_custom_call.1} parent=1 // pred_fallthru
      _
    // Predicated region
    $region18: #{tpu_custom_call.1} parent=1 // pred_check
      _
    $region19: #{tpu_custom_call.1} parent=1 // pred_check_branch
      %23 = sbr.rel (0) target = $region21
    $region20: #{tpu_custom_call.1} parent=1 // pred_region
      _
    $region21: #{tpu_custom_call.1} parent=1 // pred_fallthru
      _
    // Predicated region
    $region22: #{tpu_custom_call.1} parent=1 // pred_check
      _
    $region23: #{tpu_custom_call.1} parent=1 // pred_check_branch
      %25 = sbr.rel (0) target = $region25
    $region24: #{tpu_custom_call.1} parent=1 // pred_region
      _
    $region25: #{tpu_custom_call.1} parent=1 // pred_fallthru
      _
    // Predicated region
    $region26: #{tpu_custom_call.1} parent=1 // pred_check
      _
    $region27: #{tpu_custom_call.1} parent=1 // pred_check_branch
      %27 = sbr.rel (0) target = $region29
    $region28: #{tpu_custom_call.1} parent=1 // pred_region
      _
    $region29: #{tpu_custom_call.1} parent=1 // pred_fallthru
      _
    // Predicated region
    $region30: #{tpu_custom_call.1} parent=1 // pred_check
      _
    $region31: #{tpu_custom_call.1} parent=1 // pred_check_branch
      %29 = sbr.rel (0) target = $region33
    $region32: #{tpu_custom_call.1} parent=1 // pred_region
      _
    $region33: #{tpu_custom_call.1} parent=1 // pred_fallthru
      _
    %v30 = vld [vmem:[%s0] sm:$0x3]
    %v31 = vld [vmem:[%s3] sm:$0xff]
    %v32 = vld [vmem:[%s3 + $0x8] sm:$0xff]
    %v33 = vld [vmem:[%s3 + $0x10] sm:$0xff]
    %v34 = vld [vmem:[%s3 + $0x18] sm:$0xff]
    %vm35 = vcmask 261120
    %v37 = vsel %vm35, %v30, 0
    %39 = vmatprep.subr.mxu0 0.0
    %40 = vmatpush1.msra.mxu0 0.0
    %41 = vmatprep.subr.mxu0 0.0
    %42 = vmatpush1.msra.mxu0 0.0
    %43 = vmatprep.subr.mxu0 0.0
    %44 = vmatpush1.msra.mxu0 0.0
    %45 = vmatprep.subr.mxu0 0.0
    %46 = vmatpush1.msra.mxu0 0.0
    %47 = vmatprep.subr.mxu0 0.0
    %48 = vmatpush1.msra.mxu0 0.0
    %49 = vmatprep.subr.mxu0 0.0
    %50 = vmatpush1.msra.mxu0 0.0
    %51 = vmatprep.subr.mxu0 0.0
    %52 = vmatpush1.msra.mxu0 0.0
    %53 = vmatprep.subr.mxu0 0.0
    %54 = vmatpush1.msra.mxu0 0.0
    %55 = vmatprep.subr.mxu0 0.0
    %56 = vmatpush1.msra.mxu0 0.0
    %57 = vmatprep.subr.mxu0 0.0
    %58 = vmatpush1.msra.mxu0 0.0
    %59 = vmatprep.subr.mxu0 0.0
    %60 = vmatpush1.msra.mxu0 0.0
    %61 = vmatprep.subr.mxu0 0.0
    %62 = vmatpush1.msra.mxu0 0.0
    %63 = vmatprep.subr.mxu0 0.0
    %64 = vmatpush1.msra.mxu0 %v34
    %65 = vmatprep.subr.mxu0 0.0
    %66 = vmatpush1.msra.mxu0 %v33
    %67 = vmatprep.subr.mxu0 0.0
    %68 = vmatpush1.msra.mxu0 %v32
    %69 = vmatprep.subr.mxu0 0.0
    %70 = vmatpush1.msra.mxu0 %v31
    %71 = vmatprep.subr.mxu0 0.0
    %72 = vmatpush2.msra.mxu0 0.0
    %73 = vmatprep.subr.mxu0 0.0
    %74 = vmatpush2.msra.mxu0 0.0
    %75 = vmatprep.subr.mxu0 0.0
    %76 = vmatpush2.msra.mxu0 0.0
    %77 = vmatprep.subr.mxu0 0.0
    %78 = vmatpush2.msra.mxu0 0.0
    %79 = vmatprep.subr.mxu0 0.0
    %80 = vmatpush2.msra.mxu0 0.0
    %81 = vmatprep.subr.mxu0 0.0
    %82 = vmatpush2.msra.mxu0 0.0
    %83 = vmatprep.subr.mxu0 0.0
    %84 = vmatpush2.msra.mxu0 0.0
    %85 = vmatprep.subr.mxu0 0.0
    %86 = vmatpush2.msra.mxu0 0.0
    %87 = vmatprep.subr.mxu0 0.0
    %88 = vmatpush2.msra.mxu0 0.0
    %89 = vmatprep.subr.mxu0 0.0
    %90 = vmatpush2.msra.mxu0 0.0
    %91 = vmatprep.subr.mxu0 0.0
    %92 = vmatpush2.msra.mxu0 0.0
    %93 = vmatprep.subr.mxu0 0.0
    %94 = vmatpush2.msra.mxu0 0.0
    %95 = vmatprep.subr.mxu0 0.0
    %96 = vmatpush2.msra.mxu0 0.0
    %97 = vmatprep.subr.mxu0 0.0
    %98 = vmatpush2.msra.mxu0 0.0
    %99 = vmatprep.subr.mxu0 0.0
    %100 = vmatpush2.msra.mxu0 0.0
    %101 = vmatprep.subr.mxu0 0.0
    %102 = vmatpush2.msra.mxu0 0.0
    %103 = vmatprep.mubr.f32.mxu0 0.0
    %104 = vmatmul.mubr.f32.gmra.mxu0 %v37
    %v105 = vpop.f32.mrf.mxu0
    %v106 = vadd.f32 0.0, %v105
    %v107 = vpop.f32.mrf.mxu0
    %108 = vdwg.mxu0
    %v109 = vld [vmem:[%s1] sm:$0xff]
    %v110 = vld [vmem:[%s1 + $0x8] sm:$0xff]
    %v111 = vld [vmem:[%s4] sm:$0xff]
    %v112 = vld [vmem:[%s4 + $0x8] sm:$0xff]
    %v113 = vld [vmem:[%s5] sm:$0x1]
    %v115 = vlaneseq
    %v116 = vshrl.u32 %v115, 7
    %v117 = vsub.s32 0, %v116
    %v118 = vrot.slane %v113, %v117
    %vm120 = vcmask 130048
    %v122 = vsel %vm120, %v109, 0
    %v125 = vsel %vm120, %v110, 0
    %127 = vmatprep.subr.mxu0 0.0
    %128 = vmatpush1.msra.mxu0 0.0
    %129 = vmatprep.subr.mxu0 0.0
    %130 = vmatpush1.msra.mxu0 0.0
    %131 = vmatprep.subr.mxu0 0.0
    %132 = vmatpush1.msra.mxu0 0.0
    %133 = vmatprep.subr.mxu0 0.0
    %134 = vmatpush1.msra.mxu0 0.0
    %135 = vmatprep.subr.mxu0 0.0
    %136 = vmatpush1.msra.mxu0 0.0
    %137 = vmatprep.subr.mxu0 0.0
    %138 = vmatpush1.msra.mxu0 0.0
    %139 = vmatprep.subr.mxu0 0.0
    %140 = vmatpush1.msra.mxu0 0.0
    %141 = vmatprep.subr.mxu0 0.0
    %142 = vmatpush1.msra.mxu0 0.0
    %143 = vmatprep.subr.mxu0 0.0
    %144 = vmatpush1.msra.mxu0 0.0
    %145 = vmatprep.subr.mxu0 0.0
    %146 = vmatpush1.msra.mxu0 0.0
    %147 = vmatprep.subr.mxu0 0.0
    %148 = vmatpush1.msra.mxu0 0.0
    %149 = vmatprep.subr.mxu0 0.0
    %150 = vmatpush1.msra.mxu0 0.0
    %151 = vmatprep.subr.mxu0 0.0
    %152 = vmatpush1.msra.mxu0 0.0
    %153 = vmatprep.subr.mxu0 0.0
    %154 = vmatpush1.msra.mxu0 0.0
    %155 = vmatprep.subr.mxu0 0.0
    %156 = vmatpush1.msra.mxu0 %v112
    %157 = vmatprep.subr.mxu0 0.0
    %158 = vmatpush1.msra.mxu0 %v111
    %159 = vmatprep.subr.mxu0 0.0
    %160 = vmatpush2.msra.mxu0 0.0
    %161 = vmatprep.subr.mxu0 0.0
    %162 = vmatpush2.msra.mxu0 0.0
    %163 = vmatprep.subr.mxu0 0.0
    %164 = vmatpush2.msra.mxu0 0.0
    %165 = vmatprep.subr.mxu0 0.0
    %166 = vmatpush2.msra.mxu0 0.0
    %167 = vmatprep.subr.mxu0 0.0
    %168 = vmatpush2.msra.mxu0 0.0
    %169 = vmatprep.subr.mxu0 0.0
    %170 = vmatpush2.msra.mxu0 0.0
    %171 = vmatprep.subr.mxu0 0.0
    %172 = vmatpush2.msra.mxu0 0.0
    %173 = vmatprep.subr.mxu0 0.0
    %174 = vmatpush2.msra.mxu0 0.0
    %175 = vmatprep.subr.mxu0 0.0
    %176 = vmatpush2.msra.mxu0 0.0
    %177 = vmatprep.subr.mxu0 0.0
    %178 = vmatpush2.msra.mxu0 0.0
    %179 = vmatprep.subr.mxu0 0.0
    %180 = vmatpush2.msra.mxu0 0.0
    %181 = vmatprep.subr.mxu0 0.0
    %182 = vmatpush2.msra.mxu0 0.0
    %183 = vmatprep.subr.mxu0 0.0
    %184 = vmatpush2.msra.mxu0 0.0
    %185 = vmatprep.subr.mxu0 0.0
    %186 = vmatpush2.msra.mxu0 0.0
    %187 = vmatprep.subr.mxu0 0.0
    %188 = vmatpush2.msra.mxu0 0.0
    %189 = vmatprep.subr.mxu0 0.0
    %190 = vmatpush2.msra.mxu0 0.0
    %191 = vmatprep.mubr.f32.mxu0 0.0
    %192 = vmatmul.mubr.f32.gmra.mxu0 %v122
    %v193 = vpop.f32.mrf.mxu0
    %v194 = vadd.f32 %v118, %v193
    %v195 = vpop.f32.mrf.mxu0
    %196 = vmatprep.mubr.f32.mxu0 0.0
    %197 = vmatmul.mubr.f32.gmra.mxu0 %v125
    %v198 = vpop.f32.mrf.mxu0
    %v199 = vadd.f32 %v118, %v198
    %v200 = vpop.f32.mrf.mxu0
    %201 = vdwg.mxu0
    %v204 = vunpack.c.l.s4 1966171168
    %v205 = vunpack.c.0.s8 %v204
    %v206 = vlaneseq
    %v207 = vshrl.u32 %v206, 7
    %v208 = vsub.s32 %v205, %v207
    %v209 = vrot.slane %v106, %v208
    %v210 = vcombine.high %v209, %v209
    %v212 = vunpack.c.l.s4 1966171168
    %v213 = vunpack.c.0.s8 %v212
    %v214 = vlaneseq
    %v215 = vshrl.u32 %v214, 7
    %v216 = vsub.s32 %v213, %v215
    %v217 = vrot.slane %v209, %v216
    %v219 = vunpack.c.l.s4 1966171168
    %v220 = vunpack.c.0.s8 %v219
    %v221 = vlaneseq
    %v222 = vshrl.u32 %v221, 7
    %v223 = vsub.s32 %v220, %v222
    %v224 = vrot.slane %v210, %v223
    %v225 = vlaneseq
    %v226 = vshrl.u32 %v225, 7
    %v227 = vsub.s32 0, %v226
    %v228 = vrot.slane %v217, %v227
    %v229 = vlaneseq
    %v230 = vshrl.u32 %v229, 7
    %v231 = vsub.s32 0, %v230
    %v232 = vrot.slane %v224, %v231
    %v235 = vadd.f32 %v194, %v228
    %v236 = vadd.f32 %v199, %v232
    %v237 = vmax.f32 %v235, 0.0
    %v238 = vmax.f32 %v236, 0.0
    %v239 = vld [vmem:[%s6] sm:$0xff]
    %v240 = vld [vmem:[%s6 + $0x8] sm:$0xff]
    %v241 = vld [vmem:[%s6 + $0x10] sm:$0xff]
    %v242 = vld [vmem:[%s6 + $0x18] sm:$0xff]
    %v243 = vld [vmem:[%s6 + $0x20] sm:$0xff]
    %v244 = vld [vmem:[%s6 + $0x28] sm:$0xff]
    %v245 = vld [vmem:[%s6 + $0x30] sm:$0xff]
    %v246 = vld [vmem:[%s6 + $0x38] sm:$0xff]
    %v247 = vld [vmem:[%s6 + $0x40] sm:$0xff]
    %v248 = vld [vmem:[%s6 + $0x48] sm:$0xff]
    %v249 = vld [vmem:[%s6 + $0x50] sm:$0xff]
    %v250 = vld [vmem:[%s6 + $0x58] sm:$0xff]
    %v251 = vld [vmem:[%s6 + $0x60] sm:$0xff]
    %v252 = vld [vmem:[%s6 + $0x68] sm:$0xff]
    %v253 = vld [vmem:[%s6 + $0x70] sm:$0xff]
    %v254 = vld [vmem:[%s6 + $0x78] sm:$0xff]
    %v255 = vld [vmem:[%s7] sm:$0x1]
    %v257 = vlaneseq
    %v258 = vshrl.u32 %v257, 7
    %v259 = vsub.s32 0, %v258
    %v260 = vrot.slane %v255, %v259
    %262 = vmatprep.subr.mxu0 0.0
    %263 = vmatpush1.msra.mxu0 %v254
    %264 = vmatprep.subr.mxu0 0.0
    %265 = vmatpush1.msra.mxu0 %v253
    %266 = vmatprep.subr.mxu0 0.0
    %267 = vmatpush1.msra.mxu0 %v252
    %268 = vmatprep.subr.mxu0 0.0
    %269 = vmatpush1.msra.mxu0 %v251
    %270 = vmatprep.subr.mxu0 0.0
    %271 = vmatpush1.msra.mxu0 %v250
    %272 = vmatprep.subr.mxu0 0.0
    %273 = vmatpush1.msra.mxu0 %v249
    %274 = vmatprep.subr.mxu0 0.0
    %275 = vmatpush1.msra.mxu0 %v248
    %276 = vmatprep.subr.mxu0 0.0
    %277 = vmatpush1.msra.mxu0 %v247
    %278 = vmatprep.subr.mxu0 0.0
    %279 = vmatpush1.msra.mxu0 %v246
    %280 = vmatprep.subr.mxu0 0.0
    %281 = vmatpush1.msra.mxu0 %v245
    %282 = vmatprep.subr.mxu0 0.0
    %283 = vmatpush1.msra.mxu0 %v244
    %284 = vmatprep.subr.mxu0 0.0
    %285 = vmatpush1.msra.mxu0 %v243
    %286 = vmatprep.subr.mxu0 0.0
    %287 = vmatpush1.msra.mxu0 %v242
    %288 = vmatprep.subr.mxu0 0.0
    %289 = vmatpush1.msra.mxu0 %v241
    %290 = vmatprep.subr.mxu0 0.0
    %291 = vmatpush1.msra.mxu0 %v240
    %292 = vmatprep.subr.mxu0 0.0
    %293 = vmatpush1.msra.mxu0 %v239
    %294 = vmatprep.subr.mxu0 0.0
    %295 = vmatpush2.msra.mxu0 0.0
    %296 = vmatprep.subr.mxu0 0.0
    %297 = vmatpush2.msra.mxu0 0.0
    %298 = vmatprep.subr.mxu0 0.0
    %299 = vmatpush2.msra.mxu0 0.0
    %300 = vmatprep.subr.mxu0 0.0
    %301 = vmatpush2.msra.mxu0 0.0
    %302 = vmatprep.subr.mxu0 0.0
    %303 = vmatpush2.msra.mxu0 0.0
    %304 = vmatprep.subr.mxu0 0.0
    %305 = vmatpush2.msra.mxu0 0.0
    %306 = vmatprep.subr.mxu0 0.0
    %307 = vmatpush2.msra.mxu0 0.0
    %308 = vmatprep.subr.mxu0 0.0
    %309 = vmatpush2.msra.mxu0 0.0
    %310 = vmatprep.subr.mxu0 0.0
    %311 = vmatpush2.msra.mxu0 0.0
    %312 = vmatprep.subr.mxu0 0.0
    %313 = vmatpush2.msra.mxu0 0.0
    %314 = vmatprep.subr.mxu0 0.0
    %315 = vmatpush2.msra.mxu0 0.0
    %316 = vmatprep.subr.mxu0 0.0
    %317 = vmatpush2.msra.mxu0 0.0
    %318 = vmatprep.subr.mxu0 0.0
    %319 = vmatpush2.msra.mxu0 0.0
    %320 = vmatprep.subr.mxu0 0.0
    %321 = vmatpush2.msra.mxu0 0.0
    %322 = vmatprep.subr.mxu0 0.0
    %323 = vmatpush2.msra.mxu0 0.0
    %324 = vmatprep.subr.mxu0 0.0
    %325 = vmatpush2.msra.mxu0 0.0
    %326 = vmatprep.mubr.f32.mxu0 0.0
    %327 = vmatmul.mubr.f32.gmra.mxu0 %v237
    %v328 = vpop.f32.mrf.mxu0
    %v329 = vadd.f32 %v260, %v328
    %v330 = vpop.f32.mrf.mxu0
    %331 = vmatprep.mubr.f32.mxu0 0.0
    %332 = vmatmul.mubr.f32.gmra.mxu0 %v238
    %v333 = vpop.f32.mrf.mxu0
    %v334 = vadd.f32 %v260, %v333
    %v335 = vpop.f32.mrf.mxu0
    %336 = vdwg.mxu0
    %v337 = vtanh.pop %v329
    %v338 = vtanh.pop %v334
    %v339 = vld [vmem:[%s2] sm:$0x3]
    %v342 = vunpack.c.l.s4 1966171168
    %v343 = vunpack.c.0.s8 %v342
    %v344 = vlaneseq
    %v345 = vshrl.u32 %v344, 7
    %v346 = vsub.s32 %v343, %v345
    %v347 = vrot.slane %v339, %v346
    %v348 = vcombine.high %v347, %v347
    %v350 = vunpack.c.l.s4 1966171168
    %v351 = vunpack.c.0.s8 %v350
    %v352 = vlaneseq
    %v353 = vshrl.u32 %v352, 7
    %v354 = vsub.s32 %v351, %v353
    %v355 = vrot.slane %v347, %v354
    %v357 = vunpack.c.l.s4 1966171168
    %v358 = vunpack.c.0.s8 %v357
    %v359 = vlaneseq
    %v360 = vshrl.u32 %v359, 7
    %v361 = vsub.s32 %v358, %v360
    %v362 = vrot.slane %v348, %v361
    %v363 = vlaneseq
    %v364 = vshrl.u32 %v363, 7
    %v365 = vsub.s32 0, %v364
    %v366 = vrot.slane %v355, %v365
    %v367 = vlaneseq
    %v368 = vshrl.u32 %v367, 7
    %v369 = vsub.s32 0, %v368
    %v370 = vrot.slane %v362, %v369
    %v373 = vmul.f32 %v337, %v366
    %v374 = vmul.f32 %v338, %v370
    %v375 = vsel %vm35, %v373, 0.0
    %376 = vadd.xlane.f32.xlu0 %v375
    %v377 = vpop.xlane.xlu0 %376
    %v378 = vsel %vm35, %v374, 0.0
    %379 = vadd.xlane.f32.xlu0 %v378
    %v380 = vpop.xlane.xlu0 %379
    %381 = vst [vmem:[#allocation2] sm:$0x3] 0.0
    %v384 = vlaneseq
    %v385 = vand.u32 %v384, 127
    %v386 = vlaneseq
    %v387 = vshrl.u32 %v386, 7
    %v388 = vsub.s32 %v385, %v387
    %v389 = vrot.slane %v377, %v388
    %v390 = vlaneseq
    %v391 = vshrl.u32 %v390, 7
    %v392 = vsub.s32 %v385, %v391
    %v393 = vrot.slane %v380, %v392
    %vm394 = vcmask 1041409
    %v395 = vsel %vm394, %v393, %v389
    %vm397 = vcmask 58368
    %398 = vst.msk [vmem:[#allocation2] sm:$0x3] %vm397, %v395
    // Predicated region
    $region34: #{tpu_custom_call.1} parent=1 // pred_check
      _
    $region35: #{tpu_custom_call.1} parent=1 // pred_check_branch
      %400 = sbr.rel (0) target = $region37
    $region36: #{tpu_custom_call.1} parent=1 // pred_region
      %s402 = ssub.s32 32, 32
      %403 = vsyncadd [#allocation3], %s402
      %s405 = sshll.u32 [#allocation2], 4
      %s406 = int_to_ptr.vmem [resolvable:$true] %s405
      %408 = dma.vmem_to_hbm [thread:$0]  %s406, 32, %s8, [#allocation3]
    $region37: #{tpu_custom_call.1} parent=1 // pred_fallthru
      _
    // Predicated region
    $region38: #{tpu_custom_call.1} parent=1 // pred_check
      _
    $region39: #{tpu_custom_call.1} parent=1 // pred_check_branch
      %410 = sbr.rel (0) target = $region41
    $region40: #{tpu_custom_call.1} parent=1 // pred_region
      %411 = dma.done [#allocation3], 32
    $region41: #{tpu_custom_call.1} parent=1 // pred_fallthru
      _
    %412 = vsyncpa [#allocation3], 1

</llo_original>
